<compile_context>
chip_gen: v7x
topology: tpu7x:2x2x1
jax: 0.10.0
libtpu: 0.0.40
codegen_flags: <defaults>
</compile_context>

<pallas_src>
import jax
import jax.numpy as jnp
from jax.experimental import pallas as pl
from jax.experimental.pallas import tpu as pltpu


def _projector_kernel(x_ref, w_ref, b_ref, o_ref):
    # x_ref: (tm, K)  streamed over M
    # w_ref: (K, tn)  pre-transposed weight column tile (fully resident when grid_n == 1)
    # b_ref: (1, tn)  f32 bias tile
    # o_ref: (tm, tn) lane-dense output tile
    acc = jnp.dot(x_ref[...], w_ref[...], preferred_element_type=jnp.float32)
    o_ref[...] = (acc + b_ref[...]).astype(o_ref.dtype)


def _round_down(x, m):
    return (x // m) * m


def paligemma_multimodal_projector(image_features, weight, bias, *, tm=512):
    """image_features: (B, P, K); weight: (N, K) [PyTorch nn.Linear layout]; bias: (N,)."""
    B, P, K = image_features.shape
    N, Kw = weight.shape
    assert Kw == K, "weight inner dim must match embed_dim"
    M = B * P

    x2d = image_features.reshape(M, K)
    # One-time transpose in the wrapper (hoisted/folded by XLA under jit) so the
    # kernel never transposes the weight per grid step.
    w_kn = jnp.transpose(weight)                    # (K, N)
    b2d = bias.reshape(1, N).astype(jnp.float32)    # f32 bias add before the output cast

    out_dtype = image_features.dtype
    x_size = jnp.dtype(x2d.dtype).itemsize
    w_size = jnp.dtype(w_kn.dtype).itemsize
    o_size = jnp.dtype(out_dtype).itemsize

    # ---- M tile: large by default (amortize per-step overhead), but keep
    # grid_m >= 2 so megacore sharding and DMA/compute pipelining stay alive.
    tm = min(tm, M)
    if tm < M:
        tm = max(8, _round_down(tm, 8))
    while pl.cdiv(M, tm) < 2:
        cand = max(8, _round_down(tm // 2, 8))
        if cand >= tm:
            break
        tm = cand

    # ---- N tile: fully resident weight for large M; for small M split N into
    # 2-4 lane-dense column tiles to overlap weight DMA with compute.
    tn = N
    if M <= 512 and N >= 256:
        for cand in (4, 2):
            if N % (cand * 128) == 0:
                tn = N // cand
                break

    # ---- VMEM budget: ~85% of this generation's physical VMEM; fall back to
    # more N tiles (then smaller tm) if the footprint does not fit.
    try:
        vmem_phys = int(pltpu.get_tpu_info().vmem_capacity_bytes)
    except Exception:
        vmem_phys = 64 << 20            # conservative default (v7x per-TC)
    vmem_cap = int(vmem_phys * 0.85)

    def footprint(tm_, tn_):
        return (2 * K * tn_ * w_size          # (double-buffered) weight tile
                + 2 * tm_ * K * x_size        # double-buffered x tiles
                + 2 * tn_ * 4                 # bias tile (f32)
                + 2 * tm_ * tn_ * o_size      # double-buffered out tiles
                + tm_ * tn_ * 4               # f32 matmul accumulator temp
                + (2 << 20))                  # Mosaic internal scratch headroom

    while footprint(tm, tn) > vmem_cap:
        half_tn = tn // 2
        if half_tn >= 128 and half_tn % 128 == 0 and N % half_tn == 0:
            tn = half_tn
        elif tm > 8:
            tm = max(8, _round_down(tm // 2, 8))
        else:
            break

    vmem_limit = int(min(vmem_cap, max(footprint(tm, tn), 32 << 20)))

    grid_n = N // tn
    grid_m = pl.cdiv(M, tm)   # ragged final M block is masked by Pallas on writeback
    grid = (grid_n, grid_m)   # M innermost: weight tile DMA'd once per column tile

    cost = pl.CostEstimate(
        flops=2 * M * K * N,
        transcendentals=0,
        bytes_accessed=M * K * x_size + K * N * w_size + N * 4 + M * N * o_size,
    )

    out2d = pl.pallas_call(
        _projector_kernel,
        out_shape=jax.ShapeDtypeStruct((M, N), out_dtype),
        grid_spec=pltpu.PrefetchScalarGridSpec(
            num_scalar_prefetch=0,
            grid=grid,
            in_specs=[
                pl.BlockSpec((tm, K), lambda j, i: (i, 0)),   # x: streamed over M, reused across j
                pl.BlockSpec((K, tn), lambda j, i: (0, j)),   # weight: resident / per-column tile
                pl.BlockSpec((1, tn), lambda j, i: (0, j)),   # bias
            ],
            out_specs=pl.BlockSpec((tm, tn), lambda j, i: (i, j)),  # lane-dense output
        ),
        compiler_params=pltpu.CompilerParams(
            dimension_semantics=("parallel", "parallel"),
            vmem_limit_bytes=vmem_limit,
        ),
        cost_estimate=cost,
    )(x2d, w_kn, b2d)

    return out2d.reshape(B, P, N)


if __name__ == "__main__":
    # Small shapes consistent with the module: (B, num_patches, embed_dim) -> projection_dim.
    batch, num_patches = 2, 16
    embed_dim, projection_dim = 128, 256

    key = jax.random.PRNGKey(0)
    k_x, k_w, k_b = jax.random.split(key, 3)

    image_features = jax.random.normal(
        k_x, (batch, num_patches, embed_dim), dtype=jnp.float32)
    # PyTorch nn.Linear layout: weight (out_features, in_features), bias (out_features,)
    weight = jax.random.normal(
        k_w, (projection_dim, embed_dim), dtype=jnp.float32) * 0.02
    bias = jax.random.normal(k_b, (projection_dim,), dtype=jnp.float32) * 0.01

    fn = jax.jit(paligemma_multimodal_projector)
    out = jax.block_until_ready(fn(image_features, weight, bias))

    # Reference (nn.Linear semantics): y = x @ W.T + b
    ref = jnp.einsum("bpk,nk->bpn", image_features, weight,
                     precision=jax.lax.Precision.HIGHEST) + bias
    assert out.shape == (batch, num_patches, projection_dim)
    assert jnp.allclose(out, ref, atol=1e-3, rtol=1e-3), float(jnp.max(jnp.abs(out - ref)))

    print("KERNEL_OK")
</pallas_src>

<mosaic_0001>
module attributes {stable_mosaic.version = 11 : i64} {
  func.func @_projector_kernel(%arg0: i32, %arg1: i32, %arg2: memref<16x128xf32, #tpu.memory_space<vmem>>, %arg3: memref<128x128xf32, #tpu.memory_space<vmem>>, %arg4: memref<1x128xf32, #tpu.memory_space<vmem>>, %arg5: memref<16x128xf32, #tpu.memory_space<vmem>>) attributes {dimension_semantics = [#tpu.dimension_semantics<parallel>, #tpu.dimension_semantics<parallel>], iteration_bounds = array<i64: 2, 2>, scalar_prefetch = 0 : i64, scratch_operands = 0 : i64, tpu.core_type = #tpu.core_type<tc>, window_params = [{transform_indices = @transform_0, window_bounds = array<i64: 16, 128>}, {transform_indices = @transform_1, window_bounds = array<i64: 128, 128>}, {transform_indices = @transform_2, window_bounds = array<i64: 1, 128>}, {transform_indices = @transform_3, window_bounds = array<i64: 16, 128>}]} {
    %c0 = arith.constant 0 : index
    %c0_0 = arith.constant 0 : index
    %0 = vector.load %arg2[%c0, %c0_0] : memref<16x128xf32, #tpu.memory_space<vmem>>, vector<16x128xf32>
    %c0_1 = arith.constant 0 : index
    %c0_2 = arith.constant 0 : index
    %1 = vector.load %arg3[%c0_1, %c0_2] : memref<128x128xf32, #tpu.memory_space<vmem>>, vector<128x128xf32>
    %cst = arith.constant dense<0.000000e+00> : vector<16x128xf32>
    %2 = tpu.matmul %0, %1, %cst {dimension_numbers = #tpu.dot_dimension_numbers<[1], [0], [0], [1], [0, 0, 1, 1], [], []>} : vector<16x128xf32>, vector<128x128xf32>, vector<16x128xf32> -> vector<16x128xf32>
    %c0_3 = arith.constant 0 : index
    %c0_4 = arith.constant 0 : index
    %3 = vector.load %arg4[%c0_3, %c0_4] : memref<1x128xf32, #tpu.memory_space<vmem>>, vector<1x128xf32>
    %4 = vector.broadcast %3 : vector<1x128xf32> to vector<16x128xf32>
    %5 = arith.addf %2, %4 : vector<16x128xf32>
    %c0_5 = arith.constant 0 : index
    %c0_6 = arith.constant 0 : index
    %6 = vector.load %arg5[%c0_5, %c0_6] : memref<16x128xf32, #tpu.memory_space<vmem>>, vector<16x128xf32>
    tpu.vector_store %arg5[%c0_5, %c0_6], %5 {strides = array<i32>} : memref<16x128xf32, #tpu.memory_space<vmem>>, vector<16x128xf32>,
    return
  }
  func.func @transform_0(%arg0: i32, %arg1: i32) -> (i32, i32) {
    %c0_i32 = arith.constant 0 : i32
    %c0_i32_0 = arith.constant 0 : i32
    return %arg1, %c0_i32 : i32, i32
  }
  func.func @transform_1(%arg0: i32, %arg1: i32) -> (i32, i32) {
    %c0_i32 = arith.constant 0 : i32
    %c0_i32_0 = arith.constant 0 : i32
    return %c0_i32, %arg0 : i32, i32
  }
  func.func @transform_2(%arg0: i32, %arg1: i32) -> (i32, i32) {
    %c0_i32 = arith.constant 0 : i32
    %c0_i32_0 = arith.constant 0 : i32
    return %c0_i32, %arg0 : i32, i32
  }
  func.func @transform_3(%arg0: i32, %arg1: i32) -> (i32, i32) {
    %c0_i32 = arith.constant 0 : i32
    return %arg1, %arg0 : i32, i32
  }
}

</mosaic_0001>

<llo_original>
// kernel: paligemma_multimodal_projector.1
$region0: #{paligemma_multimodal_projector.1}
  #allocation0 [shape = 'u32[]', space=smem, size = 0x4, offset = 0x4, fixed_abs, tag = 'smem constant byte address 0x4 - core index']
  #allocation1 [shape = 'u32[144,128]{1,0:T(1,128)}', space=vmem, size = 0x12000, scoped, tag = 'internal scratch']
  %s0 = inlined_call_operand.vmem [shape: f32[32,128], index: 0, kind: input, shape index: {}]
  %s1 = inlined_call_operand.vmem [shape: f32[128,256], index: 1, kind: input, shape index: {}]
  %s2 = inlined_call_operand.vmem [shape: f32[1,256], index: 2, kind: input, shape index: {}]
  %s3 = inlined_call_operand.hbm [shape: f32[32,256], index: 3, kind: output, shape index: {}]
  %s4 = sld [smem:[#allocation0]]
  $region83: #{paligemma_multimodal_projector.1} parent=0
    _
  %s6 = ssub.s32 1, %s4
  %s7 = scalar_select 0, %s6, %s4
  $region1: #{paligemma_multimodal_projector.1} parent=0
    #allocation2 [shape = 'u8[131072]{0}', space=vmem, size = 0x20000, scoped, tag = 'input window, operand 1']
    #allocation3 [shape = 'u8[16384]{0}', space=vmem, size = 0x4000, scoped, tag = 'output window, operand 0']
    #allocation4 [shape = 's32[2]{0}', space=sflag, size = 0x8, scoped, tag = 'scoped memory for paligemma_multimodal_projector.1']
    %8 = vsyncpa [#allocation4], 0
    %s9 = scalar_lea.sflag [#allocation4], 1
    %10 = vsyncpa %s9, 0
    loop: start=0, step=1, limit=6
    $region2: #{paligemma_multimodal_projector.1} parent=1 // loop_pre_header
      _
    $region3: #{paligemma_multimodal_projector.1} parent=1 // loop_header
      %s12 = sphi 0, %s16
      %p13 = scmp.ge.s32.totalorder %s12, 6
      %s19 = sphi 0, %s31
      %s20 = sphi 0, %s27
      %s21 = sphi 0, %s19
      %s22 = sphi 0, %s20
      %s23 = sphi 0, %s21
      %s24 = sphi 0, %s22
      %s34 = sphi 0, %s36
      %s37 = sphi 0, %s34
      %s38 = sphi 0, %s37
      %s54 = sphi 0, %s38
      %s60 = sphi 0, %s62
      %s63 = sphi 0, %s60
      %s64 = sphi 0, %s63
      %s80 = sphi 0, %s64
      %s86 = sphi 0, %s88
      %s89 = sphi 0, %s86
      %s90 = sphi 0, %s89
      %s106 = sphi 0, %s90
      %s114 = sphi 0, %s116
      %s117 = sphi 0, %s114
      %s118 = sphi 0, %s117
      %s134 = sphi 0, %s118
    $region4: #{paligemma_multimodal_projector.1} parent=1 // loop_header_branch
      %15 = sbr.rel (%p13) target = $region8
    $region5: #{paligemma_multimodal_projector.1} parent=1 // loop_body
      %s17 = ssub.s32 %s12, 1
      %s18 = ssub.s32 %s12, 2
      %s25 = sadd.s32 1, %s20
      %p26 = scmp.ge.s32.totalorder %s25, 2
      %s27 = scalar_select %p26, 0, %s25
      %s28 = sadd.s32 1, %s19
      %s29 = scalar_select %p26, %s28, %s19
      %p30 = scmp.ge.s32.totalorder %s29, 2
      %s31 = scalar_select %p30, 0, %s29
      %s32 = ssub.s32 %s20, %s27
      %p33 = scmp.eq.s32.totalorder %s32, 0
      %s35 = sadd.s32 %s34, 1
      %s36 = scalar_select %p33, %s34, %s35
      %p39 = pneg %p33
      %p40 = scmp.eq.s32.totalorder %s12, 3
      %p41 = por %p39, %p40
      %p42 = scmp.ne.s32.totalorder %s34, %s37
      %p43 = scmp.eq.s32.totalorder %s12, 0
      %p44 = por %p42, %p43
      %p45 = scmp.ne.s32.totalorder %s34, %s37
      %p46 = scmp.eq.s32.totalorder %s17, 3
      %p47 = por %p45, %p46
      %p48 = scmp.ne.s32.totalorder %s37, %s38
      %p49 = scmp.eq.s32.totalorder %s17, 0
      %p50 = por %p48, %p49
      %p51 = scmp.ne.s32.totalorder %s37, %s38
      %p52 = scmp.eq.s32.totalorder %s18, 3
      %p53 = por %p51, %p52
      %p55 = scmp.ne.s32.totalorder %s38, %s54
      %p56 = scmp.eq.s32.totalorder %s18, 0
      %p57 = por %p55, %p56
      %s58 = ssub.s32 %s19, %s31
      %p59 = scmp.eq.s32.totalorder %s58, 0
      %s61 = sadd.s32 %s60, 1
      %s62 = scalar_select %p59, %s60, %s61
      %p65 = pneg %p59
      %p66 = scmp.eq.s32.totalorder %s12, 3
      %p67 = por %p65, %p66
      %p68 = scmp.ne.s32.totalorder %s60, %s63
      %p69 = scmp.eq.s32.totalorder %s12, 0
      %p70 = por %p68, %p69
      %p71 = scmp.ne.s32.totalorder %s60, %s63
      %p72 = scmp.eq.s32.totalorder %s17, 3
      %p73 = por %p71, %p72
      %p74 = scmp.ne.s32.totalorder %s63, %s64
      %p75 = scmp.eq.s32.totalorder %s17, 0
      %p76 = por %p74, %p75
      %p77 = scmp.ne.s32.totalorder %s63, %s64
      %p78 = scmp.eq.s32.totalorder %s18, 3
      %p79 = por %p77, %p78
      %p81 = scmp.ne.s32.totalorder %s64, %s80
      %p82 = scmp.eq.s32.totalorder %s18, 0
      %p83 = por %p81, %p82
      %s84 = ssub.s32 %s19, %s31
      %p85 = scmp.eq.s32.totalorder %s84, 0
      %s87 = sadd.s32 %s86, 1
      %s88 = scalar_select %p85, %s86, %s87
      %p91 = pneg %p85
      %p92 = scmp.eq.s32.totalorder %s12, 3
      %p93 = por %p91, %p92
      %p94 = scmp.ne.s32.totalorder %s86, %s89
      %p95 = scmp.eq.s32.totalorder %s12, 0
      %p96 = por %p94, %p95
      %p97 = scmp.ne.s32.totalorder %s86, %s89
      %p98 = scmp.eq.s32.totalorder %s17, 3
      %p99 = por %p97, %p98
      %p100 = scmp.ne.s32.totalorder %s89, %s90
      %p101 = scmp.eq.s32.totalorder %s17, 0
      %p102 = por %p100, %p101
      %p103 = scmp.ne.s32.totalorder %s89, %s90
      %p104 = scmp.eq.s32.totalorder %s18, 3
      %p105 = por %p103, %p104
      %p107 = scmp.ne.s32.totalorder %s90, %s106
      %p108 = scmp.eq.s32.totalorder %s18, 0
      %p109 = por %p107, %p108
      %s110 = ssub.s32 %s20, %s27
      %s111 = ssub.s32 %s19, %s31
      %s112 = sor.u32 %s110, %s111
      %p113 = scmp.eq.s32.totalorder %s112, 0
      %s115 = sadd.s32 %s114, 1
      %s116 = scalar_select %p113, %s114, %s115
      %p119 = pneg %p113
      %p120 = scmp.eq.s32.totalorder %s12, 3
      %p121 = por %p119, %p120
      %p122 = scmp.ne.s32.totalorder %s114, %s117
      %p123 = scmp.eq.s32.totalorder %s12, 0
      %p124 = por %p122, %p123
      %p125 = scmp.ne.s32.totalorder %s114, %s117
      %p126 = scmp.eq.s32.totalorder %s17, 3
      %p127 = por %p125, %p126
      %p128 = scmp.ne.s32.totalorder %s117, %s118
      %p129 = scmp.eq.s32.totalorder %s17, 0
      %p130 = por %p128, %p129
      %p131 = scmp.ne.s32.totalorder %s117, %s118
      %p132 = scmp.eq.s32.totalorder %s18, 3
      %p133 = por %p131, %p132
      %p135 = scmp.ne.s32.totalorder %s118, %s134
      %p136 = scmp.eq.s32.totalorder %s18, 0
      %p137 = por %p135, %p136
      %p138 = scmp.le.s32.totalorder 1, %s12
      %p139 = scmp.lt.s32.totalorder %s12, 5
      %p140 = pnand %p138, %p139
      %p141 = pneg %p140
      // Predicated region
      $region9: #{paligemma_multimodal_projector.1} parent=5 // pred_check
        _
      $region10: #{paligemma_multimodal_projector.1} parent=5 // pred_check_branch
        %143 = sbr.rel (%p140) target = $region12
      $region11: #{paligemma_multimodal_projector.1} parent=5 // pred_region
        %s144 = ssub.s32 %s12, 1
      $region12: #{paligemma_multimodal_projector.1} parent=5 // pred_fallthru
        _
      %p145 = scmp.lt.s32.totalorder %s12, 4
      // Predicated region
      $region13: #{paligemma_multimodal_projector.1} parent=5 // pred_check
        %p146 = pneg %p145
      $region14: #{paligemma_multimodal_projector.1} parent=5 // pred_check_branch
        %148 = sbr.rel (%p146) target = $region16
      $region15: #{paligemma_multimodal_projector.1} parent=5 // pred_region
        // Predicated region
        $region17: #{paligemma_multimodal_projector.1} parent=15 // pred_check
          %p149 = pneg %p44
        $region18: #{paligemma_multimodal_projector.1} parent=15 // pred_check_branch
          %151 = sbr.rel (%p149) target = $region20
        $region19: #{paligemma_multimodal_projector.1} parent=15 // pred_region
          %s152 = smul.u32 2, %s20
          %p153 = scmp.lt.s32.totalorder %s152, 3
          %s154 = scalar_select %p153, %s152, 3
          %s155 = smul.addr %s154, 8
          %s156 = scalar_lea.vmem %s0, %s155
          %s157 = smul.u32 2, %s20
        $region20: #{paligemma_multimodal_projector.1} parent=15 // pred_fallthru
          _
        // Predicated region
        $region21: #{paligemma_multimodal_projector.1} parent=15 // pred_check
          %p158 = pneg %p70
        $region22: #{paligemma_multimodal_projector.1} parent=15 // pred_check_branch
          %160 = sbr.rel (%p158) target = $region24
        $region23: #{paligemma_multimodal_projector.1} parent=15 // pred_region
          %s161 = sand.u32 %s60, 1
          %s162 = sand.u32 %s60, 1
          %s163 = smul.addr %s162, 128
          %s164 = scalar_lea.vmem [#allocation2], %s163
          %s165 = smul.addr %s19, 8
          %s166 = scalar_lea.vmem %s1, %s165
          // Predicated region
          $region25: #{paligemma_multimodal_projector.1} parent=23 // pred_check
            _
          $region26: #{paligemma_multimodal_projector.1} parent=23 // pred_check_branch
            %168 = sbr.rel (0) target = $region28
          $region27: #{paligemma_multimodal_projector.1} parent=23 // pred_region
            // Predicated region
            $region29: #{paligemma_multimodal_projector.1} parent=27 // pred_check
              _
            $region30: #{paligemma_multimodal_projector.1} parent=27 // pred_check_branch
              %170 = sbr.rel (0) target = $region32
            $region31: #{paligemma_multimodal_projector.1} parent=27 // pred_region
              // Predicated region
              $region44: #{paligemma_multimodal_projector.1} parent=31 // pred_check
                _
              $region45: #{paligemma_multimodal_projector.1} parent=31 // pred_check_branch
                %215 = sbr.rel (0) target = $region47
              $region46: #{paligemma_multimodal_projector.1} parent=31 // pred_region
                loop: start=0, step=1, limit=1
                $region48: #{paligemma_multimodal_projector.1} parent=46 // loop_pre_header
                  _
                $region49: #{paligemma_multimodal_projector.1} parent=46 // loop_header
                  %s217 = sphi 0, %s221
                  %p218 = scmp.ge.s32.totalorder %s217, 1
                  %s222 = sphi %s166, %s166
                  %s223 = sphi %s164, %s164
                $region50: #{paligemma_multimodal_projector.1} parent=46 // loop_header_branch
                  %220 = sbr.rel (%p218) target = $region54
                $region51: #{paligemma_multimodal_projector.1} parent=46 // loop_body
                  %v224 = vld [vmem:[%s222] sm:$0xff]
                  %225 = vst [vmem:[%s223] sm:$0xff] %v224
                  %v226 = vld [vmem:[%s222 + $0x10] sm:$0xff]
                  %227 = vst [vmem:[%s223 + $0x8] sm:$0xff] %v226
                  %v228 = vld [vmem:[%s222 + $0x20] sm:$0xff]
                  %229 = vst [vmem:[%s223 + $0x10] sm:$0xff] %v228
                  %v230 = vld [vmem:[%s222 + $0x30] sm:$0xff]
                  %231 = vst [vmem:[%s223 + $0x18] sm:$0xff] %v230
                  %v232 = vld [vmem:[%s222 + $0x40] sm:$0xff]
                  %233 = vst [vmem:[%s223 + $0x20] sm:$0xff] %v232
                  %v234 = vld [vmem:[%s222 + $0x50] sm:$0xff]
                  %235 = vst [vmem:[%s223 + $0x28] sm:$0xff] %v234
                  %v236 = vld [vmem:[%s222 + $0x60] sm:$0xff]
                  %237 = vst [vmem:[%s223 + $0x30] sm:$0xff] %v236
                  %v238 = vld [vmem:[%s222 + $0x70] sm:$0xff]
                  %239 = vst [vmem:[%s223 + $0x38] sm:$0xff] %v238
                  %v240 = vld [vmem:[%s222 + $0x80] sm:$0xff]
                  %241 = vst [vmem:[%s223 + $0x40] sm:$0xff] %v240
                  %v242 = vld [vmem:[%s222 + $0x90] sm:$0xff]
                  %243 = vst [vmem:[%s223 + $0x48] sm:$0xff] %v242
                  %v244 = vld [vmem:[%s222 + $0xa0] sm:$0xff]
                  %245 = vst [vmem:[%s223 + $0x50] sm:$0xff] %v244
                  %v246 = vld [vmem:[%s222 + $0xb0] sm:$0xff]
                  %247 = vst [vmem:[%s223 + $0x58] sm:$0xff] %v246
                  %v248 = vld [vmem:[%s222 + $0xc0] sm:$0xff]
                  %249 = vst [vmem:[%s223 + $0x60] sm:$0xff] %v248
                  %v250 = vld [vmem:[%s222 + $0xd0] sm:$0xff]
                  %251 = vst [vmem:[%s223 + $0x68] sm:$0xff] %v250
                  %v252 = vld [vmem:[%s222 + $0xe0] sm:$0xff]
                  %253 = vst [vmem:[%s223 + $0x70] sm:$0xff] %v252
                  %v254 = vld [vmem:[%s222 + $0xf0] sm:$0xff]
                  %255 = vst [vmem:[%s223 + $0x78] sm:$0xff] %v254
                $region52: #{paligemma_multimodal_projector.1} parent=46 // loop_footer
                  %s221 = sadd.s32 1, %s217
                $region53: #{paligemma_multimodal_projector.1} parent=46 // loop_footer_branch
                  %216 = sbr.rel target = $region49
                $region54: #{paligemma_multimodal_projector.1} parent=46 // loop_exit
                  _
              $region47: #{paligemma_multimodal_projector.1} parent=31 // pred_fallthru
                _
              // Predicated region
              $region55: #{paligemma_multimodal_projector.1} parent=31 // pred_check
                _
              $region56: #{paligemma_multimodal_projector.1} parent=31 // pred_check_branch
                %257 = sbr.rel target = $region58
              $region57: #{paligemma_multimodal_projector.1} parent=31 // pred_region
                _
              $region58: #{paligemma_multimodal_projector.1} parent=31 // pred_fallthru
                _
            $region32: #{paligemma_multimodal_projector.1} parent=27 // pred_fallthru
              _
            // Predicated region
            $region33: #{paligemma_multimodal_projector.1} parent=27 // pred_check
              _
            $region34: #{paligemma_multimodal_projector.1} parent=27 // pred_check_branch
              %172 = sbr.rel target = $region36
            $region35: #{paligemma_multimodal_projector.1} parent=27 // pred_region
              loop: start=0, step=1, limit=1
              $region37: #{paligemma_multimodal_projector.1} parent=35 // loop_pre_header
                _
              $region38: #{paligemma_multimodal_projector.1} parent=35 // loop_header
                %s175 = sphi 0, %s179
                %p176 = scmp.ge.s32.totalorder %s175, 1
                %s180 = sphi %s166, %s166
                %s181 = sphi %s164, %s164
              $region39: #{paligemma_multimodal_projector.1} parent=35 // loop_header_branch
                %178 = sbr.rel (%p176) target = $region43
              $region40: #{paligemma_multimodal_projector.1} parent=35 // loop_body
                %v182 = vld [vmem:[%s180] sm:$0xff]
                %183 = vst [vmem:[%s181] sm:$0xff] %v182
                %v184 = vld [vmem:[%s180 + $0x10] sm:$0xff]
                %185 = vst [vmem:[%s181 + $0x8] sm:$0xff] %v184
                %v186 = vld [vmem:[%s180 + $0x20] sm:$0xff]
                %187 = vst [vmem:[%s181 + $0x10] sm:$0xff] %v186
                %v188 = vld [vmem:[%s180 + $0x30] sm:$0xff]
                %189 = vst [vmem:[%s181 + $0x18] sm:$0xff] %v188
                %v190 = vld [vmem:[%s180 + $0x40] sm:$0xff]
                %191 = vst [vmem:[%s181 + $0x20] sm:$0xff] %v190
                %v192 = vld [vmem:[%s180 + $0x50] sm:$0xff]
                %193 = vst [vmem:[%s181 + $0x28] sm:$0xff] %v192
                %v194 = vld [vmem:[%s180 + $0x60] sm:$0xff]
                %195 = vst [vmem:[%s181 + $0x30] sm:$0xff] %v194
                %v196 = vld [vmem:[%s180 + $0x70] sm:$0xff]
                %197 = vst [vmem:[%s181 + $0x38] sm:$0xff] %v196
                %v198 = vld [vmem:[%s180 + $0x80] sm:$0xff]
                %199 = vst [vmem:[%s181 + $0x40] sm:$0xff] %v198
                %v200 = vld [vmem:[%s180 + $0x90] sm:$0xff]
                %201 = vst [vmem:[%s181 + $0x48] sm:$0xff] %v200
                %v202 = vld [vmem:[%s180 + $0xa0] sm:$0xff]
                %203 = vst [vmem:[%s181 + $0x50] sm:$0xff] %v202
                %v204 = vld [vmem:[%s180 + $0xb0] sm:$0xff]
                %205 = vst [vmem:[%s181 + $0x58] sm:$0xff] %v204
                %v206 = vld [vmem:[%s180 + $0xc0] sm:$0xff]
                %207 = vst [vmem:[%s181 + $0x60] sm:$0xff] %v206
                %v208 = vld [vmem:[%s180 + $0xd0] sm:$0xff]
                %209 = vst [vmem:[%s181 + $0x68] sm:$0xff] %v208
                %v210 = vld [vmem:[%s180 + $0xe0] sm:$0xff]
                %211 = vst [vmem:[%s181 + $0x70] sm:$0xff] %v210
                %v212 = vld [vmem:[%s180 + $0xf0] sm:$0xff]
                %213 = vst [vmem:[%s181 + $0x78] sm:$0xff] %v212
              $region41: #{paligemma_multimodal_projector.1} parent=35 // loop_footer
                %s179 = sadd.s32 1, %s175
              $region42: #{paligemma_multimodal_projector.1} parent=35 // loop_footer_branch
                %174 = sbr.rel target = $region38
              $region43: #{paligemma_multimodal_projector.1} parent=35 // loop_exit
                _
            $region36: #{paligemma_multimodal_projector.1} parent=27 // pred_fallthru
              _
          $region28: #{paligemma_multimodal_projector.1} parent=23 // pred_fallthru
            _
          %258 = vnop
        $region24: #{paligemma_multimodal_projector.1} parent=15 // pred_fallthru
          _
        // Predicated region
        $region59: #{paligemma_multimodal_projector.1} parent=15 // pred_check
          %p259 = pneg %p96
        $region60: #{paligemma_multimodal_projector.1} parent=15 // pred_check_branch
          %261 = sbr.rel (%p259) target = $region62
        $region61: #{paligemma_multimodal_projector.1} parent=15 // pred_region
          %p262 = scmp.lt.s32.totalorder %s19, 1
          %s263 = scalar_select %p262, %s19, 1
          %s264 = scalar_lea.vmem %s2, %s263
        $region62: #{paligemma_multimodal_projector.1} parent=15 // pred_fallthru
          _
      $region16: #{paligemma_multimodal_projector.1} parent=5 // pred_fallthru
        _
      %p265 = scmp.le.s32.totalorder 1, %s12
      %p266 = scmp.lt.s32.totalorder %s12, 5
      %p267 = pnand %p265, %p266
      %p268 = pneg %p267
      // Predicated region
      $region63: #{paligemma_multimodal_projector.1} parent=5 // pred_check
        _
      $region64: #{paligemma_multimodal_projector.1} parent=5 // pred_check_branch
        %270 = sbr.rel (%p267) target = $region66
      $region65: #{paligemma_multimodal_projector.1} parent=5 // pred_region
        %s271 = ssub.s32 %s12, 1
        %s272 = sand.u32 %s63, 1
        %s273 = sand.u32 %s63, 1
        %s274 = smul.addr %s273, 128
        %s275 = scalar_lea.vmem [#allocation2], %s274
        // Predicated region
        $region67: #{paligemma_multimodal_projector.1} parent=65 // pred_check
          %p276 = pneg %p76
        $region68: #{paligemma_multimodal_projector.1} parent=65 // pred_check_branch
          %278 = sbr.rel (%p276) target = $region70
        $region69: #{paligemma_multimodal_projector.1} parent=65 // pred_region
          _
        $region70: #{paligemma_multimodal_projector.1} parent=65 // pred_fallthru
          _
        %s279 = smul.u32 2, %s22
        %p280 = scmp.lt.s32.totalorder %s279, 3
        %s281 = scalar_select %p280, %s279, 3
        %s282 = smul.addr %s281, 8
        %s283 = scalar_lea.vmem %s0, %s282
        %p284 = pneg %p50
        %p285 = pneg %p47
        %s286 = sand.u32 %s63, 1
        %s287 = sand.u32 %s63, 1
        %s288 = smul.addr %s287, 128
        %s289 = scalar_lea.vmem [#allocation2], %s288
        %p290 = pneg %p76
        %p291 = pneg %p73
        %p292 = scmp.lt.s32.totalorder %s21, 1
        %s293 = scalar_select %p292, %s21, 1
        %s294 = scalar_lea.vmem %s2, %s293
        %p295 = pneg %p102
        %p296 = pneg %p99
        %p297 = pneg %p130
        %p298 = pneg %p127
        %s299 = sand.u32 %s117, 1
        %s300 = scalar_lea.sflag [#allocation4], %s299
        %s301 = sand.u32 %s117, 1
        %s302 = smul.addr %s301, 16
        %s303 = scalar_lea.vmem [#allocation3], %s302
        %s304 = smul.u32 2, %s22
        %p305 = scmp.lt.s32.totalorder %s304, 3
        %s306 = scalar_select %p305, %s304, 3
        %s307 = smul.addr %s306, 8
        %s308 = scalar_lea.vmem %s0, %s307
        %s309 = smul.u32 2, %s22
        %p310 = scmp.lt.s32.totalorder %s21, 1
        %s311 = scalar_select %p310, %s21, 1
        %s312 = scalar_lea.vmem %s2, %s311
        %s313 = smul.u32 2, %s22
        %v314 = vld [vmem:[%s308] sm:$0xff]
        %v315 = vld [vmem:[%s308 + $0x8] sm:$0xff]
        %v316 = vld [vmem:[%s275] sm:$0xff]
        %v317 = vld [vmem:[%s275 + $0x8] sm:$0xff]
        %v318 = vld [vmem:[%s275 + $0x10] sm:$0xff]
        %v319 = vld [vmem:[%s275 + $0x18] sm:$0xff]
        %v320 = vld [vmem:[%s275 + $0x20] sm:$0xff]
        %v321 = vld [vmem:[%s275 + $0x28] sm:$0xff]
        %v322 = vld [vmem:[%s275 + $0x30] sm:$0xff]
        %v323 = vld [vmem:[%s275 + $0x38] sm:$0xff]
        %v324 = vld [vmem:[%s275 + $0x40] sm:$0xff]
        %v325 = vld [vmem:[%s275 + $0x48] sm:$0xff]
        %v326 = vld [vmem:[%s275 + $0x50] sm:$0xff]
        %v327 = vld [vmem:[%s275 + $0x58] sm:$0xff]
        %v328 = vld [vmem:[%s275 + $0x60] sm:$0xff]
        %v329 = vld [vmem:[%s275 + $0x68] sm:$0xff]
        %v330 = vld [vmem:[%s275 + $0x70] sm:$0xff]
        %v331 = vld [vmem:[%s275 + $0x78] sm:$0xff]
        %v332 = vld [vmem:[%s312] sm:$0x1]
        %v334 = vlaneseq
        %v335 = vshrl.u32 %v334, 7
        %v336 = vsub.s32 0, %v335
        %v337 = vrot.slane %v332, %v336
        %339 = vmatprep.subr.mxu0 0.0
        %340 = vmatpush1.msra.mxu0 %v316
        %341 = vmatprep.subr.mxu0 0.0
        %342 = vmatpush1.msra.mxu0 %v317
        %343 = vmatprep.subr.mxu0 0.0
        %344 = vmatpush1.msra.mxu0 %v318
        %345 = vmatprep.subr.mxu0 0.0
        %346 = vmatpush1.msra.mxu0 %v319
        %347 = vmatprep.subr.mxu0 0.0
        %348 = vmatpush1.msra.mxu0 %v320
        %349 = vmatprep.subr.mxu0 0.0
        %350 = vmatpush1.msra.mxu0 %v321
        %351 = vmatprep.subr.mxu0 0.0
        %352 = vmatpush1.msra.mxu0 %v322
        %353 = vmatprep.subr.mxu0 0.0
        %354 = vmatpush1.msra.mxu0 %v323
        %355 = vmatprep.subr.mxu0 0.0
        %356 = vmatpush1.msra.mxu0 %v324
        %357 = vmatprep.subr.mxu0 0.0
        %358 = vmatpush1.msra.mxu0 %v325
        %359 = vmatprep.subr.mxu0 0.0
        %360 = vmatpush1.msra.mxu0 %v326
        %361 = vmatprep.subr.mxu0 0.0
        %362 = vmatpush1.msra.mxu0 %v327
        %363 = vmatprep.subr.mxu0 0.0
        %364 = vmatpush1.msra.mxu0 %v328
        %365 = vmatprep.subr.mxu0 0.0
        %366 = vmatpush1.msra.mxu0 %v329
        %367 = vmatprep.subr.mxu0 0.0
        %368 = vmatpush1.msra.mxu0 %v330
        %369 = vmatprep.subr.mxu0 0.0
        %370 = vmatpush1.msra.mxu0 %v331
        %371 = vmatprep.subr.mxu0 0.0
        %372 = vmatpush1.msra.mxu0 0.0
        %373 = vmatprep.subr.mxu0 0.0
        %374 = vmatpush1.msra.mxu0 0.0
        %375 = vmatprep.subr.mxu0 0.0
        %376 = vmatpush1.msra.mxu0 0.0
        %377 = vmatprep.subr.mxu0 0.0
        %378 = vmatpush1.msra.mxu0 0.0
        %379 = vmatprep.subr.mxu0 0.0
        %380 = vmatpush1.msra.mxu0 0.0
        %381 = vmatprep.subr.mxu0 0.0
        %382 = vmatpush1.msra.mxu0 0.0
        %383 = vmatprep.subr.mxu0 0.0
        %384 = vmatpush1.msra.mxu0 0.0
        %385 = vmatprep.subr.mxu0 0.0
        %386 = vmatpush1.msra.mxu0 0.0
        %387 = vmatprep.subr.mxu0 0.0
        %388 = vmatpush1.msra.mxu0 0.0
        %389 = vmatprep.subr.mxu0 0.0
        %390 = vmatpush1.msra.mxu0 0.0
        %391 = vmatprep.subr.mxu0 0.0
        %392 = vmatpush1.msra.mxu0 0.0
        %393 = vmatprep.subr.mxu0 0.0
        %394 = vmatpush1.msra.mxu0 0.0
        %395 = vmatprep.subr.mxu0 0.0
        %396 = vmatpush1.msra.mxu0 0.0
        %397 = vmatprep.subr.mxu0 0.0
        %398 = vmatpush1.msra.mxu0 0.0
        %399 = vmatprep.subr.mxu0 0.0
        %400 = vmatpush1.msra.mxu0 0.0
        %401 = vmatprep.subr.mxu0 0.0
        %402 = vmatpush1.msra.mxu0 0.0
        %403 = vmatprep.mubr.f32.mxu0 0.0
        %404 = vmatmul.mubr.f32.gmra.mrb[0].mxu0 %v314
        %v405 = vpop.f32.mrb[0].mxu0
        %v406 = vadd.f32 %v337, %v405
        %v407 = vpop.f32.mrb[0].mxu0
        %408 = vmatprep.mubr.f32.mxu0 0.0
        %409 = vmatmul.mubr.f32.gmra.mrb[0].mxu0 %v315
        %v410 = vpop.f32.mrb[0].mxu0
        %v411 = vadd.f32 %v337, %v410
        %v412 = vpop.f32.mrb[0].mxu0
        %413 = vdwg.mxu0
        %414 = vst [vmem:[%s303] sm:$0xff] %v406
        %415 = vst [vmem:[%s303 + $0x8] sm:$0xff] %v411
        %s416 = sand.u32 %s117, 1
        %s417 = scalar_lea.sflag [#allocation4], %s416
        %s418 = sand.u32 %s117, 1
        %s419 = smul.addr %s418, 16
        %s420 = scalar_lea.vmem [#allocation3], %s419
        // Predicated region
        $region71: #{paligemma_multimodal_projector.1} parent=65 // pred_check
          %p421 = pneg %p127
        $region72: #{paligemma_multimodal_projector.1} parent=65 // pred_check_branch
          %423 = sbr.rel (%p421) target = $region74
        $region73: #{paligemma_multimodal_projector.1} parent=65 // pred_region
          %s424 = smul.u32 2, %s22
          %s426 = ssub.s32 256, 256
          %427 = vsyncadd %s417, %s426
          %s428 = smul.addr %s424, 2
          %s429 = sadd.s32 %s21, %s428
          %s430 = smul.addr %s429, 128
          %s431 = scalar_lea.hbm %s3, %s430
          %s432 = sshll.u32 %s420, 4
          %s433 = int_to_ptr.vmem [resolvable:$true] %s432
          %438 = dma.vmem_to_hbm [thread:$0]  %s433, 256, %s431, %s417, 128, 256, 8
        $region74: #{paligemma_multimodal_projector.1} parent=65 // pred_fallthru
          _
      $region66: #{paligemma_multimodal_projector.1} parent=5 // pred_fallthru
        _
      %p439 = scmp.le.s32.totalorder 2, %s12
      // Predicated region
      $region75: #{paligemma_multimodal_projector.1} parent=5 // pred_check
        %p440 = pneg %p439
      $region76: #{paligemma_multimodal_projector.1} parent=5 // pred_check_branch
        %442 = sbr.rel (%p440) target = $region78
      $region77: #{paligemma_multimodal_projector.1} parent=5 // pred_region
        %s443 = ssub.s32 %s12, 2
        // Predicated region
        $region79: #{paligemma_multimodal_projector.1} parent=77 // pred_check
          %p444 = pneg %p133
        $region80: #{paligemma_multimodal_projector.1} parent=77 // pred_check_branch
          %446 = sbr.rel (%p444) target = $region82
        $region81: #{paligemma_multimodal_projector.1} parent=77 // pred_region
          %s447 = sand.u32 %s118, 1
          %s448 = scalar_lea.sflag [#allocation4], %s447
          %s449 = sand.u32 %s118, 1
          %s450 = smul.addr %s449, 16
          %s451 = scalar_lea.vmem [#allocation3], %s450
          %452 = dma.done %s448, 256
        $region82: #{paligemma_multimodal_projector.1} parent=77 // pred_fallthru
          _
      $region78: #{paligemma_multimodal_projector.1} parent=5 // pred_fallthru
        _
    $region6: #{paligemma_multimodal_projector.1} parent=1 // loop_footer
      %s16 = sadd.s32 1, %s12
    $region7: #{paligemma_multimodal_projector.1} parent=1 // loop_footer_branch
      %11 = sbr.rel target = $region3
    $region8: #{paligemma_multimodal_projector.1} parent=1 // loop_exit
      _
    %453 = vsyncpa [#allocation4], 1
    %s454 = scalar_lea.sflag [#allocation4], 1
    %455 = vsyncpa %s454, 1

</llo_original>
